<compile_context>
chip_gen: v7x
topology: tpu7x:2x2x1
jax: 0.10.0
libtpu: 0.0.40
codegen_flags: <defaults>
</compile_context>

<pallas_src>
import math

import numpy as np
import jax
import jax.numpy as jnp
from jax.experimental import pallas as pl
from jax.experimental.pallas import tpu as pltpu


# ----------------------------------------------------------------------------
# Deterministic Hadamard matrix construction (mirrors get_hadK's role)
# ----------------------------------------------------------------------------
def _is_pow2(n: int) -> bool:
    return n > 0 and (n & (n - 1)) == 0


def _round_up(x: int, m: int) -> int:
    return ((x + m - 1) // m) * m


def _sylvester_hadamard(m: int) -> np.ndarray:
    """+-1 Hadamard matrix of power-of-two order m (Sylvester construction)."""
    assert _is_pow2(m)
    H = np.array([[1.0]], dtype=np.float32)
    while H.shape[0] < m:
        H = np.block([[H, H], [H, -H]])
    return H


def _paley_hadamard_12() -> np.ndarray:
    """Deterministic +-1 Hadamard matrix of order 12 (Paley-I, q=11).

    Stands in for QuaRot's hard-coded had12 constants (a valid order-12
    Hadamard matrix of the same class, but NOT elementwise identical to the
    QuaRot table).
    """
    q = 11
    residues = {(i * i) % q for i in range(1, q)}

    def chi(a: int) -> int:
        a %= q
        if a == 0:
            return 0
        return 1 if a in residues else -1

    Q = np.array([[chi(j - i) for j in range(q)] for i in range(q)], dtype=np.float32)
    S = np.zeros((q + 1, q + 1), dtype=np.float32)
    S[0, 1:] = 1.0
    S[1:, 0] = -1.0
    S[1:, 1:] = Q
    H = S + np.eye(q + 1, dtype=np.float32)
    assert np.allclose(H @ H.T, (q + 1) * np.eye(q + 1))
    return H


def get_hadK(n: int):
    """Mirror of quarot.functional.hadamard.get_hadK for K in {1, 12}."""
    if n % 12 == 0 and _is_pow2(n // 12):
        return _paley_hadamard_12(), 12
    assert _is_pow2(n), f"unsupported hadamard_dim {n}"
    return None, 1
    # TODO(synk): QuaRot also supports K in {20,28,36,40,52,60,108,140,156,172};
    # only the K=1 and K=12 branches are materialized here.


# ----------------------------------------------------------------------------
# Pallas kernels
# ----------------------------------------------------------------------------
def _hadamard_matmul_kernel(x_ref, t_ref, o_ref):
    # Dense path: one MXU matmul per row tile, f32 accumulation.
    o_ref[...] = jnp.dot(
        x_ref[...], t_ref[...], preferred_element_type=jnp.float32
    ).astype(o_ref.dtype)


def _hadamard_matmul_kacc_kernel(x_ref, t_ref, o_ref, acc_ref):
    # K-tiled reduction path: grid = (row_tiles, k_tiles), k is the reduction axis.
    @pl.when(pl.program_id(1) == 0)
    def _():
        acc_ref[...] = jnp.zeros_like(acc_ref)

    acc_ref[...] += jnp.dot(
        x_ref[...], t_ref[...], preferred_element_type=jnp.float32
    )

    @pl.when(pl.program_id(1) == pl.num_programs(1) - 1)
    def _():
        o_ref[...] = acc_ref[...].astype(o_ref.dtype)


# ----------------------------------------------------------------------------
# Tiling / sizing helpers
# ----------------------------------------------------------------------------
_MXU_ROW_ALIGN = 256                    # fills v6e/v7x MXU M dim; multiple of 128 for v5e
_TARGET_TILE_BYTES = 8 * 1024 * 1024    # per-input-tile cap: keep several grid steps in flight


def _physical_vmem_bytes() -> int:
    try:
        info = pltpu.get_tpu_info()
        v = getattr(info, "vmem_capacity_bytes", None)
        if v:
            return int(v)
    except Exception:
        pass
    return 64 * 1024 * 1024             # conservative fallback (v7x per-TensorCore)


def _align_rows(rows: int, row_align: int) -> int:
    if rows >= _MXU_ROW_ALIGN:
        return (rows // _MXU_ROW_ALIGN) * _MXU_ROW_ALIGN
    return max(row_align, (rows // row_align) * row_align)


def _auto_block_rows(R, R_aligned, max_rows_vmem, n, x_itemsize, row_align):
    rows = min(max_rows_vmem, R_aligned)
    # Big enough to amortize the ~0.35 us/step pipeline overhead, small enough
    # to keep multiple grid steps available for DMA/compute overlap.
    rows = min(rows, max(_MXU_ROW_ALIGN, _TARGET_TILE_BYTES // (n * x_itemsize)))
    # v7x megacore: keep >= 2 row blocks so both TensorCores get a partition.
    if R > 2 * _MXU_ROW_ALIGN:
        rows = min(rows, _round_up(pl.cdiv(R, 2), _MXU_ROW_ALIGN))
    return _align_rows(rows, row_align)


# ----------------------------------------------------------------------------
# Pallas wrapper:  out = cast( x_rows @ T , x_rows.dtype )
# ----------------------------------------------------------------------------
def matmul_hadU_pallas(
    x_rows: jax.Array,
    t: jax.Array,
    *,
    block_rows: int | None = None,
    vmem_budget_bytes: int | None = None,
    force_k_reduction: bool = False,
    k_tile: int | None = None,
) -> jax.Array:
    """x_rows: (R, n); t: (n, n) pre-transposed & pre-scaled transform."""
    R, n = x_rows.shape
    assert t.shape == (n, n)
    assert x_rows.dtype == t.dtype, "activations and transform must share a dtype"

    x_itemsize = np.dtype(x_rows.dtype).itemsize
    t_itemsize = np.dtype(t.dtype).itemsize
    row_align = 16 if x_itemsize < 4 else 8
    R_aligned = _round_up(R, row_align)

    phys_vmem = _physical_vmem_bytes()
    if vmem_budget_bytes is None:
        # ~96 MiB on v5e/v6e (128 MiB physical), ~48 MiB on v7x (64 MiB).
        vmem_budget_bytes = (phys_vmem * 3) // 4
    budget = vmem_budget_bytes
    vmem_limit = int(min(phys_vmem - (4 << 20), max(budget + (8 << 20), 32 << 20)))

    cost = pl.CostEstimate(
        flops=2 * R * n * n,
        transcendentals=0,
        bytes_accessed=2 * R * n * x_itemsize + n * n * t_itemsize,
    )
    out_shape = jax.ShapeDtypeStruct((R, n), x_rows.dtype)

    # --- path selection: dense (n, n) transform vs K-tiled reduction --------
    min_rows = min(R_aligned, _MXU_ROW_ALIGN)
    t_vmem = n * n * t_itemsize                 # single-buffered T
    per_row = 4 * n * x_itemsize                # double-buffered in + out row tiles
    dense_fits = (t_vmem + per_row * min_rows) <= budget

    if dense_fits and not force_k_reduction:
        if block_rows is None:
            max_rows_vmem = (budget - t_vmem) // per_row
            block_rows = _auto_block_rows(
                R, R_aligned, max_rows_vmem, n, x_itemsize, row_align
            )
        else:
            block_rows = max(row_align, min(_round_up(block_rows, row_align), R_aligned))
        grid = (pl.cdiv(R, block_rows),)        # ragged last block is masked by Pallas

        def _call_dense(single_buffer_t: bool):
            if single_buffer_t:
                # T's block index is constant across the grid -> single buffer.
                t_spec = pl.BlockSpec(
                    (n, n), lambda i: (0, 0), pipeline_mode=pl.Buffered(1)
                )
            else:
                t_spec = pl.BlockSpec((n, n), lambda i: (0, 0))
            return pl.pallas_call(
                _hadamard_matmul_kernel,
                out_shape=out_shape,
                grid=grid,
                in_specs=[pl.BlockSpec((block_rows, n), lambda i: (i, 0)), t_spec],
                out_specs=pl.BlockSpec((block_rows, n), lambda i: (i, 0)),
                compiler_params=pltpu.CompilerParams(
                    dimension_semantics=("parallel",),
                    vmem_limit_bytes=vmem_limit,
                ),
                cost_estimate=cost,
            )(x_rows, t)

        try:
            return _call_dense(True)
        except Exception:
            # Installed jax rejects pipeline_mode -> fall back to default
            # (double-buffered) T; everything else is unchanged.
            return _call_dense(False)

    # --- K-tiled reduction path (large n: dense T would not fit VMEM) -------
    tk_candidates = (k_tile,) if k_tile is not None else (2048, 1024, 512, 256, 128)
    tk = None
    for cand in tk_candidates:
        if cand is None or n % cand != 0:
            continue
        t_tiles = 2 * cand * n * t_itemsize                     # double-buffered T slabs
        per_row_k = 4 * n + 2 * n * x_itemsize + 2 * cand * x_itemsize
        if t_tiles + per_row_k * min_rows <= budget:
            tk = cand
            t_vmem = t_tiles
            per_row = per_row_k
            break
    if tk is None:
        # TODO(synk): for very large n, use the factored kron(hadK, H_m)
        # transform (WHT over m + small K-mix) instead of any dense slab.
        raise ValueError(
            f"hadamard_dim={n} with dtype {x_rows.dtype} does not fit a "
            f"{budget >> 20} MiB VMEM budget even with a K-tiled transform."
        )

    if block_rows is None:
        max_rows_vmem = (budget - t_vmem) // per_row
        block_rows = _auto_block_rows(
            R, R_aligned, max_rows_vmem, n, x_itemsize, row_align
        )
    else:
        block_rows = max(row_align, min(_round_up(block_rows, row_align), R_aligned))

    grid = (pl.cdiv(R, block_rows), n // tk)
    return pl.pallas_call(
        _hadamard_matmul_kacc_kernel,
        out_shape=out_shape,
        grid=grid,
        in_specs=[
            pl.BlockSpec((block_rows, tk), lambda i, k: (i, k)),
            pl.BlockSpec((tk, n), lambda i, k: (k, 0)),
        ],
        out_specs=pl.BlockSpec((block_rows, n), lambda i, k: (i, 0)),
        scratch_shapes=[pltpu.VMEM((block_rows, n), jnp.float32)],
        compiler_params=pltpu.CompilerParams(
            dimension_semantics=("parallel", "arbitrary"),
            vmem_limit_bytes=vmem_limit,
        ),
        cost_estimate=cost,
    )(x_rows, t)


# ----------------------------------------------------------------------------
# Module equivalent
# ----------------------------------------------------------------------------
class OnlineHadamard:
    """JAX/Pallas equivalent of QuaRot's OnlineHadamard module (forward only)."""

    def __init__(self, hadamard_dim: int, force_fp32: bool = False,
                 block_rows: int | None = None):
        self.fp32_had = force_fp32
        self.n = hadamard_dim
        self.block_rows = block_rows
        hadK, self.rem_dim = get_hadK(hadamard_dim)
        m = hadamard_dim // self.rem_dim
        Hm = _sylvester_hadamard(m)
        T = Hm if hadK is None else np.kron(hadK, Hm)
        # out = x @ T.T / sqrt(n)  -> pre-transpose & fold the 1/sqrt(n) scale.
        T = T.T / math.sqrt(hadamard_dim)
        self._T_f32 = jnp.asarray(T, dtype=jnp.float32)
        self._T_bf16 = self._T_f32.astype(jnp.bfloat16)

    def __call__(self, x: jax.Array) -> jax.Array:
        x_dtype = x.dtype
        assert x.shape[-1] == self.n
        lead = x.shape[:-1]
        xr = x.reshape(-1, self.n)

        if self.fp32_had:
            # Matches the PyTorch module: x.float() -> fp32 Hadamard -> cast back.
            t, x_in = self._T_f32, xr.astype(jnp.float32)
        elif x_dtype == jnp.bfloat16 or x_dtype == jnp.float16:
            # Half stays half: bf16 operands, f32 MXU accumulation.
            # TODO(synk): fp16 rides the bf16 MXU path (TPU has no fp16 MXU);
            # numerics differ slightly from PyTorch's fp16 matmul.
            t, x_in = self._T_bf16, xr.astype(jnp.bfloat16)
        else:
            t, x_in = self._T_f32, xr.astype(jnp.float32)

        out = matmul_hadU_pallas(x_in, t, block_rows=self.block_rows)
        return out.reshape(*lead, self.n).astype(x_dtype)


# ----------------------------------------------------------------------------
# Demo / correctness check
# ----------------------------------------------------------------------------
if __name__ == "__main__":
    key = jax.random.PRNGKey(0)
    k1, k2, k3 = jax.random.split(key, 3)

    # Case 1: K=12 branch (hadamard_dim = 12 * 16), bf16 activations, fp32_had,
    # auto-sized row tiles (dense single-buffered-T path).
    hadamard_dim = 192
    batch, seq = 2, 8
    x1 = jax.random.normal(k1, (batch, seq, hadamard_dim), dtype=jnp.float32)
    x1 = x1.astype(jnp.bfloat16)

    mod1 = OnlineHadamard(hadamard_dim, force_fp32=True)
    out1 = jax.block_until_ready(mod1(x1))

    T1 = np.asarray(mod1._T_f32)  # already transposed & scaled by 1/sqrt(n)
    assert np.allclose(T1 @ T1.T, np.eye(hadamard_dim), atol=1e-4)  # orthonormal
    x1_f32 = np.asarray(x1.astype(jnp.float32))
    ref1 = (x1_f32.reshape(-1, hadamard_dim) @ T1).reshape(x1.shape)
    got1 = np.asarray(out1.astype(jnp.float32))
    np.testing.assert_allclose(got1, ref1, atol=5e-2, rtol=5e-2)
    assert out1.shape == x1.shape and out1.dtype == x1.dtype

    # Case 2: K=1 branch (power-of-two dim), f32 activations, explicit small
    # block_rows -> multi-step "parallel" grid with a ragged, masked last block.
    hadamard_dim2 = 256
    x2 = jax.random.normal(k2, (3, 40, hadamard_dim2), dtype=jnp.float32)
    mod2 = OnlineHadamard(hadamard_dim2, force_fp32=False, block_rows=64)
    out2 = jax.block_until_ready(mod2(x2))

    T2 = np.asarray(mod2._T_f32)
    assert np.allclose(T2 @ T2.T, np.eye(hadamard_dim2), atol=1e-4)
    ref2 = (np.asarray(x2).reshape(-1, hadamard_dim2) @ T2).reshape(x2.shape)
    got2 = np.asarray(out2)
    np.testing.assert_allclose(got2, ref2, atol=2e-2, rtol=2e-2)
    assert out2.shape == x2.shape and out2.dtype == x2.dtype

    # Case 3: forced K-tiled reduction path (used automatically when a dense
    # (n, n) transform would not fit the VMEM budget at large n).
    x3 = jax.random.normal(k3, (144, hadamard_dim2), dtype=jnp.float32)
    out3 = jax.block_until_ready(
        matmul_hadU_pallas(x3, mod2._T_f32, block_rows=64,
                           force_k_reduction=True, k_tile=128)
    )
    ref3 = np.asarray(x3) @ T2
    np.testing.assert_allclose(np.asarray(out3), ref3, atol=2e-2, rtol=2e-2)

    print("KERNEL_OK")
</pallas_src>

<mosaic_0001>
module attributes {stable_mosaic.version = 11 : i64} {
  func.func @_hadamard_matmul_kernel(%arg0: i32, %arg1: memref<16x192xf32, #tpu.memory_space<vmem>>, %arg2: memref<192x192xf32, #tpu.memory_space<vmem>>, %arg3: memref<16x192xf32, #tpu.memory_space<vmem>>) attributes {dimension_semantics = [#tpu.dimension_semantics<parallel>], iteration_bounds = array<i64: 1>, scalar_prefetch = 0 : i64, scratch_operands = 0 : i64, tpu.core_type = #tpu.core_type<tc>, window_params = [{transform_indices = @transform_0, window_bounds = array<i64: 16, 192>}, {pipeline_mode = #tpu.pipeline_mode<synchronous>, transform_indices = @transform_1, window_bounds = array<i64: 192, 192>}, {transform_indices = @transform_2, window_bounds = array<i64: 16, 192>}]} {
    %c0 = arith.constant 0 : index
    %c0_0 = arith.constant 0 : index
    %0 = vector.load %arg1[%c0, %c0_0] : memref<16x192xf32, #tpu.memory_space<vmem>>, vector<16x192xf32>
    %c0_1 = arith.constant 0 : index
    %c0_2 = arith.constant 0 : index
    %1 = vector.load %arg2[%c0_1, %c0_2] : memref<192x192xf32, #tpu.memory_space<vmem>>, vector<192x192xf32>
    %cst = arith.constant dense<0.000000e+00> : vector<16x192xf32>
    %2 = tpu.matmul %0, %1, %cst {dimension_numbers = #tpu.dot_dimension_numbers<[1], [0], [0], [1], [0, 0, 1, 1], [], []>} : vector<16x192xf32>, vector<192x192xf32>, vector<16x192xf32> -> vector<16x192xf32>
    %c0_3 = arith.constant 0 : index
    %c0_4 = arith.constant 0 : index
    %3 = vector.load %arg3[%c0_3, %c0_4] : memref<16x192xf32, #tpu.memory_space<vmem>>, vector<16x192xf32>
    tpu.vector_store %arg3[%c0_3, %c0_4], %2 {strides = array<i32>} : memref<16x192xf32, #tpu.memory_space<vmem>>, vector<16x192xf32>,
    return
  }
  func.func @transform_0(%arg0: i32) -> (i32, i32) {
    %c0_i32 = arith.constant 0 : i32
    %c0_i32_0 = arith.constant 0 : i32
    return %arg0, %c0_i32 : i32, i32
  }
  func.func @transform_1(%arg0: i32) -> (i32, i32) {
    %c0_i32 = arith.constant 0 : i32
    %c0_i32_0 = arith.constant 0 : i32
    %c0_i32_1 = arith.constant 0 : i32
    return %c0_i32, %c0_i32_0 : i32, i32
  }
  func.func @transform_2(%arg0: i32) -> (i32, i32) {
    %c0_i32 = arith.constant 0 : i32
    %c0_i32_0 = arith.constant 0 : i32
    return %arg0, %c0_i32 : i32, i32
  }
}

module attributes {stable_mosaic.version = 11 : i64} {
  func.func @_hadamard_matmul_kernel(%arg0: i32, %arg1: memref<16x192xf32, #tpu.memory_space<vmem>>, %arg2: memref<192x192xf32, #tpu.memory_space<vmem>>, %arg3: memref<16x192xf32, #tpu.memory_space<vmem>>) attributes {dimension_semantics = [#tpu.dimension_semantics<parallel>], iteration_bounds = array<i64: 1>, scalar_prefetch = 0 : i64, scratch_operands = 0 : i64, tpu.core_type = #tpu.core_type<tc>, window_params = [{transform_indices = @transform_0, window_bounds = array<i64: 16, 192>}, {pipeline_mode = #tpu.pipeline_mode<synchronous>, transform_indices = @transform_1, window_bounds = array<i64: 192, 192>}, {transform_indices = @transform_2, window_bounds = array<i64: 16, 192>}]} {
    %c0 = arith.constant 0 : index
    %c0_0 = arith.constant 0 : index
    %0 = vector.load %arg1[%c0, %c0_0] : memref<16x192xf32, #tpu.memory_space<vmem>>, vector<16x192xf32>
    %c0_1 = arith.constant 0 : index
    %c0_2 = arith.constant 0 : index
    %1 = vector.load %arg2[%c0_1, %c0_2] : memref<192x192xf32, #tpu.memory_space<vmem>>, vector<192x192xf32>
    %cst = arith.constant dense<0.000000e+00> : vector<16x192xf32>
    %2 = tpu.matmul %0, %1, %cst {dimension_numbers = #tpu.dot_dimension_numbers<[1], [0], [0], [1], [0, 0, 1, 1], [], []>} : vector<16x192xf32>, vector<192x192xf32>, vector<16x192xf32> -> vector<16x192xf32>
    %c0_3 = arith.constant 0 : index
    %c0_4 = arith.constant 0 : index
    %3 = vector.load %arg3[%c0_3, %c0_4] : memref<16x192xf32, #tpu.memory_space<vmem>>, vector<16x192xf32>
    tpu.vector_store %arg3[%c0_3, %c0_4], %2 {strides = array<i32>} : memref<16x192xf32, #tpu.memory_space<vmem>>, vector<16x192xf32>,
    return
  }
  func.func @transform_0(%arg0: i32) -> (i32, i32) {
    %c0_i32 = arith.constant 0 : i32
    %c0_i32_0 = arith.constant 0 : i32
    return %arg0, %c0_i32 : i32, i32
  }
  func.func @transform_1(%arg0: i32) -> (i32, i32) {
    %c0_i32 = arith.constant 0 : i32
    %c0_i32_0 = arith.constant 0 : i32
    %c0_i32_1 = arith.constant 0 : i32
    return %c0_i32, %c0_i32_0 : i32, i32
  }
  func.func @transform_2(%arg0: i32) -> (i32, i32) {
    %c0_i32 = arith.constant 0 : i32
    %c0_i32_0 = arith.constant 0 : i32
    return %arg0, %c0_i32 : i32, i32
  }
}

</mosaic_0001>

<llo_original>
// kernel: tpu_custom_call.1
$region0: #{tpu_custom_call.1}
  #allocation0 [shape = 'u32[]', space=smem, size = 0x4, offset = 0x4, fixed_abs, tag = 'smem constant byte address 0x4 - core index']
  #allocation1 [shape = 'u32[144,128]{1,0:T(1,128)}', space=vmem, size = 0x12000, scoped, tag = 'internal scratch']
  %s0 = inlined_call_operand.hbm [shape: f32[16,192], index: 0, kind: input, shape index: {}]
  %s1 = inlined_call_operand.hbm [shape: f32[192,192], index: 1, kind: input, shape index: {}]
  %s2 = inlined_call_operand.hbm [shape: f32[16,192], index: 2, kind: output, shape index: {}]
  %s3 = sld [smem:[#allocation0]]
  $region26: #{tpu_custom_call.1} parent=0
    _
  %s5 = ssub.s32 1, %s3
  %s6 = scalar_select 0, %s5, %s3
  $region1: #{tpu_custom_call.1} parent=0
    #allocation2 [shape = 'u8[16384]{0}', space=vmem, size = 0x4000, scoped, tag = 'input window, operand 0, single buffered']
    #allocation3 [shape = 's32[1]{0}', space=sflag, size = 0x4, scoped, tag = 'scoped memory for tpu_custom_call.1']
    #allocation4 [shape = 's32[1]{0}', space=sflag, size = 0x4, scoped, tag = 'scoped memory for tpu_custom_call.1']
    #allocation5 [shape = 'u8[196608]{0}', space=vmem, size = 0x30000, scoped, tag = 'input window, operand 1, single buffered']
    #allocation6 [shape = 's32[1]{0}', space=sflag, size = 0x4, scoped, tag = 'scoped memory for tpu_custom_call.1']
    #allocation7 [shape = 'u8[16384]{0}', space=vmem, size = 0x4000, scoped, tag = 'output window, operand 0, single buffered']
    %7 = vsyncpa [#allocation3], 0
    %8 = vsyncpa [#allocation6], 0
    %9 = vsyncpa [#allocation4], 0
    // Predicated region
    $region2: #{tpu_custom_call.1} parent=1 // pred_check
      _
    $region3: #{tpu_custom_call.1} parent=1 // pred_check_branch
      %11 = sbr.rel (0) target = $region5
    $region4: #{tpu_custom_call.1} parent=1 // pred_region
      %s13 = ssub.s32 512, 512
      %14 = vsyncadd [#allocation3], %s13
      %s15 = sshll.u32 [#allocation2], 4
      %s16 = int_to_ptr.vmem [resolvable:$true] %s15
      %21 = dma.hbm_to_vmem [thread:$0]  %s0, 512, %s16, [#allocation3], 256, 256, 16
    $region5: #{tpu_custom_call.1} parent=1 // pred_fallthru
      _
    // Predicated region
    $region6: #{tpu_custom_call.1} parent=1 // pred_check
      _
    $region7: #{tpu_custom_call.1} parent=1 // pred_check_branch
      %23 = sbr.rel (0) target = $region9
    $region8: #{tpu_custom_call.1} parent=1 // pred_region
      %s25 = ssub.s32 6144, 6144
      %26 = vsyncadd [#allocation6], %s25
      %s27 = sshll.u32 [#allocation5], 4
      %s28 = int_to_ptr.vmem [resolvable:$true] %s27
      %33 = dma.hbm_to_vmem [thread:$0]  %s1, 6144, %s28, [#allocation6], 256, 256, 16
    $region9: #{tpu_custom_call.1} parent=1 // pred_fallthru
      _
    // Predicated region
    $region10: #{tpu_custom_call.1} parent=1 // pred_check
      _
    $region11: #{tpu_custom_call.1} parent=1 // pred_check_branch
      %35 = sbr.rel (0) target = $region13
    $region12: #{tpu_custom_call.1} parent=1 // pred_region
      %36 = dma.done [#allocation3], 512
    $region13: #{tpu_custom_call.1} parent=1 // pred_fallthru
      _
    // Predicated region
    $region14: #{tpu_custom_call.1} parent=1 // pred_check
      _
    $region15: #{tpu_custom_call.1} parent=1 // pred_check_branch
      %38 = sbr.rel (0) target = $region17
    $region16: #{tpu_custom_call.1} parent=1 // pred_region
      %39 = dma.done [#allocation6], 6144
    $region17: #{tpu_custom_call.1} parent=1 // pred_fallthru
      _
    %v40 = vld [vmem:[#allocation2] sm:$0xff]
    %v41 = vld [vmem:[#allocation2 + $0x8] sm:$0xff]
    %v42 = vld [vmem:[#allocation2 + $0x10] sm:$0xff]
    %v43 = vld [vmem:[#allocation2 + $0x18] sm:$0xff]
    %v44 = vld [vmem:[#allocation5] sm:$0xff]
    %v45 = vld [vmem:[#allocation5 + $0x8] sm:$0xff]
    %v46 = vld [vmem:[#allocation5 + $0x10] sm:$0xff]
    %v47 = vld [vmem:[#allocation5 + $0x18] sm:$0xff]
    %v48 = vld [vmem:[#allocation5 + $0x20] sm:$0xff]
    %v49 = vld [vmem:[#allocation5 + $0x28] sm:$0xff]
    %v50 = vld [vmem:[#allocation5 + $0x30] sm:$0xff]
    %v51 = vld [vmem:[#allocation5 + $0x38] sm:$0xff]
    %v52 = vld [vmem:[#allocation5 + $0x40] sm:$0xff]
    %v53 = vld [vmem:[#allocation5 + $0x48] sm:$0xff]
    %v54 = vld [vmem:[#allocation5 + $0x50] sm:$0xff]
    %v55 = vld [vmem:[#allocation5 + $0x58] sm:$0xff]
    %v56 = vld [vmem:[#allocation5 + $0x60] sm:$0xff]
    %v57 = vld [vmem:[#allocation5 + $0x68] sm:$0xff]
    %v58 = vld [vmem:[#allocation5 + $0x70] sm:$0xff]
    %v59 = vld [vmem:[#allocation5 + $0x78] sm:$0xff]
    %v60 = vld [vmem:[#allocation5 + $0x80] sm:$0xff]
    %v61 = vld [vmem:[#allocation5 + $0x88] sm:$0xff]
    %v62 = vld [vmem:[#allocation5 + $0x90] sm:$0xff]
    %v63 = vld [vmem:[#allocation5 + $0x98] sm:$0xff]
    %v64 = vld [vmem:[#allocation5 + $0xa0] sm:$0xff]
    %v65 = vld [vmem:[#allocation5 + $0xa8] sm:$0xff]
    %v66 = vld [vmem:[#allocation5 + $0xb0] sm:$0xff]
    %v67 = vld [vmem:[#allocation5 + $0xb8] sm:$0xff]
    %v68 = vld [vmem:[#allocation5 + $0xc0] sm:$0xff]
    %v69 = vld [vmem:[#allocation5 + $0xc8] sm:$0xff]
    %v70 = vld [vmem:[#allocation5 + $0xd0] sm:$0xff]
    %v71 = vld [vmem:[#allocation5 + $0xd8] sm:$0xff]
    %v72 = vld [vmem:[#allocation5 + $0xe0] sm:$0xff]
    %v73 = vld [vmem:[#allocation5 + $0xe8] sm:$0xff]
    %v74 = vld [vmem:[#allocation5 + $0xf0] sm:$0xff]
    %v75 = vld [vmem:[#allocation5 + $0xf8] sm:$0xff]
    %v76 = vld [vmem:[#allocation5 + $0x100] sm:$0xff]
    %v77 = vld [vmem:[#allocation5 + $0x108] sm:$0xff]
    %v78 = vld [vmem:[#allocation5 + $0x110] sm:$0xff]
    %v79 = vld [vmem:[#allocation5 + $0x118] sm:$0xff]
    %v80 = vld [vmem:[#allocation5 + $0x120] sm:$0xff]
    %v81 = vld [vmem:[#allocation5 + $0x128] sm:$0xff]
    %v82 = vld [vmem:[#allocation5 + $0x130] sm:$0xff]
    %v83 = vld [vmem:[#allocation5 + $0x138] sm:$0xff]
    %v84 = vld [vmem:[#allocation5 + $0x140] sm:$0xff]
    %v85 = vld [vmem:[#allocation5 + $0x148] sm:$0xff]
    %v86 = vld [vmem:[#allocation5 + $0x150] sm:$0xff]
    %v87 = vld [vmem:[#allocation5 + $0x158] sm:$0xff]
    %v88 = vld [vmem:[#allocation5 + $0x160] sm:$0xff]
    %v89 = vld [vmem:[#allocation5 + $0x168] sm:$0xff]
    %v90 = vld [vmem:[#allocation5 + $0x170] sm:$0xff]
    %v91 = vld [vmem:[#allocation5 + $0x178] sm:$0xff]
    %vm92 = vcmask 523264
    %v94 = vsel %vm92, %v41, 0
    %v97 = vsel %vm92, %v43, 0
    %99 = vmatprep.subr.mxu0 %v45
    %100 = vmatpush1.msra.mxu0 %v44
    %101 = vmatprep.subr.mxu0 %v47
    %102 = vmatpush1.msra.mxu0 %v46
    %103 = vmatprep.subr.mxu0 %v49
    %104 = vmatpush1.msra.mxu0 %v48
    %105 = vmatprep.subr.mxu0 %v51
    %106 = vmatpush1.msra.mxu0 %v50
    %107 = vmatprep.subr.mxu0 %v53
    %108 = vmatpush1.msra.mxu0 %v52
    %109 = vmatprep.subr.mxu0 %v55
    %110 = vmatpush1.msra.mxu0 %v54
    %111 = vmatprep.subr.mxu0 %v57
    %112 = vmatpush1.msra.mxu0 %v56
    %113 = vmatprep.subr.mxu0 %v59
    %114 = vmatpush1.msra.mxu0 %v58
    %115 = vmatprep.subr.mxu0 %v61
    %116 = vmatpush1.msra.mxu0 %v60
    %117 = vmatprep.subr.mxu0 %v63
    %118 = vmatpush1.msra.mxu0 %v62
    %119 = vmatprep.subr.mxu0 %v65
    %120 = vmatpush1.msra.mxu0 %v64
    %121 = vmatprep.subr.mxu0 %v67
    %122 = vmatpush1.msra.mxu0 %v66
    %123 = vmatprep.subr.mxu0 %v69
    %124 = vmatpush1.msra.mxu0 %v68
    %125 = vmatprep.subr.mxu0 %v71
    %126 = vmatpush1.msra.mxu0 %v70
    %127 = vmatprep.subr.mxu0 %v73
    %128 = vmatpush1.msra.mxu0 %v72
    %129 = vmatprep.subr.mxu0 %v75
    %130 = vmatpush1.msra.mxu0 %v74
    %131 = vmatprep.subr.mxu0 %v77
    %132 = vmatpush1.msra.mxu0 %v76
    %133 = vmatprep.subr.mxu0 %v79
    %134 = vmatpush1.msra.mxu0 %v78
    %135 = vmatprep.subr.mxu0 %v81
    %136 = vmatpush1.msra.mxu0 %v80
    %137 = vmatprep.subr.mxu0 %v83
    %138 = vmatpush1.msra.mxu0 %v82
    %139 = vmatprep.subr.mxu0 %v85
    %140 = vmatpush1.msra.mxu0 %v84
    %141 = vmatprep.subr.mxu0 %v87
    %142 = vmatpush1.msra.mxu0 %v86
    %143 = vmatprep.subr.mxu0 %v89
    %144 = vmatpush1.msra.mxu0 %v88
    %145 = vmatprep.subr.mxu0 %v91
    %146 = vmatpush1.msra.mxu0 %v90
    %147 = vmatprep.subr.mxu0 0.0
    %148 = vmatpush1.msra.mxu0 0.0
    %149 = vmatprep.subr.mxu0 0.0
    %150 = vmatpush1.msra.mxu0 0.0
    %151 = vmatprep.subr.mxu0 0.0
    %152 = vmatpush1.msra.mxu0 0.0
    %153 = vmatprep.subr.mxu0 0.0
    %154 = vmatpush1.msra.mxu0 0.0
    %155 = vmatprep.subr.mxu0 0.0
    %156 = vmatpush1.msra.mxu0 0.0
    %157 = vmatprep.subr.mxu0 0.0
    %158 = vmatpush1.msra.mxu0 0.0
    %159 = vmatprep.subr.mxu0 0.0
    %160 = vmatpush1.msra.mxu0 0.0
    %161 = vmatprep.subr.mxu0 0.0
    %162 = vmatpush1.msra.mxu0 0.0
    %163 = vmatprep.mubr.f32.mxu0 %v94
    %164 = vmatmul.mubr.f32.gmra.mrb[0].mxu0 %v40
    %v165 = vpop.f32.mrb[0].mxu0
    %v166 = vadd.f32 0.0, %v165
    %v167 = vpop.f32.mrb[0].mxu0
    %v168 = vadd.f32 0.0, %v167
    %169 = vmatprep.mubr.f32.mxu0 %v97
    %170 = vmatmul.mubr.f32.gmra.mrb[0].mxu0 %v42
    %v171 = vpop.f32.mrb[0].mxu0
    %v172 = vadd.f32 0.0, %v171
    %v173 = vpop.f32.mrb[0].mxu0
    %v174 = vadd.f32 0.0, %v173
    %175 = vdwg.mxu0
    %176 = vst [vmem:[#allocation7] sm:$0xff] %v166
    %177 = vst.msk [vmem:[#allocation7 + $0x8] sm:$0xff] %vm92, %v168
    %178 = vst [vmem:[#allocation7 + $0x10] sm:$0xff] %v172
    %179 = vst.msk [vmem:[#allocation7 + $0x18] sm:$0xff] %vm92, %v174
    // Predicated region
    $region18: #{tpu_custom_call.1} parent=1 // pred_check
      _
    $region19: #{tpu_custom_call.1} parent=1 // pred_check_branch
      %181 = sbr.rel (0) target = $region21
    $region20: #{tpu_custom_call.1} parent=1 // pred_region
      %s183 = ssub.s32 512, 512
      %184 = vsyncadd [#allocation4], %s183
      %s185 = sshll.u32 [#allocation7], 4
      %s186 = int_to_ptr.vmem [resolvable:$true] %s185
      %191 = dma.vmem_to_hbm [thread:$0]  %s186, 512, %s2, [#allocation4], 256, 256, 16
    $region21: #{tpu_custom_call.1} parent=1 // pred_fallthru
      _
    // Predicated region
    $region22: #{tpu_custom_call.1} parent=1 // pred_check
      _
    $region23: #{tpu_custom_call.1} parent=1 // pred_check_branch
      %193 = sbr.rel (0) target = $region25
    $region24: #{tpu_custom_call.1} parent=1 // pred_region
      %194 = dma.done [#allocation4], 512
    $region25: #{tpu_custom_call.1} parent=1 // pred_fallthru
      _
    %195 = vsyncpa [#allocation3], 1
    %196 = vsyncpa [#allocation6], 1
    %197 = vsyncpa [#allocation4], 1

// kernel: tpu_custom_call.1
$region0: #{tpu_custom_call.1}
  #allocation0 [shape = 'u32[]', space=smem, size = 0x4, offset = 0x4, fixed_abs, tag = 'smem constant byte address 0x4 - core index']
  #allocation1 [shape = 'u32[144,128]{1,0:T(1,128)}', space=vmem, size = 0x12000, scoped, tag = 'internal scratch']
  %s0 = inlined_call_operand.hbm [shape: f32[16,192], index: 0, kind: input, shape index: {}]
  %s1 = inlined_call_operand.hbm [shape: f32[192,192], index: 1, kind: input, shape index: {}]
  %s2 = inlined_call_operand.hbm [shape: f32[16,192], index: 2, kind: output, shape index: {}]
  %s3 = sld [smem:[#allocation0]]
  $region26: #{tpu_custom_call.1} parent=0
    _
  %s5 = ssub.s32 1, %s3
  %s6 = scalar_select 0, %s5, %s3
  $region1: #{tpu_custom_call.1} parent=0
    #allocation2 [shape = 'u8[16384]{0}', space=vmem, size = 0x4000, scoped, tag = 'input window, operand 0, single buffered']
    #allocation3 [shape = 's32[1]{0}', space=sflag, size = 0x4, scoped, tag = 'scoped memory for tpu_custom_call.1']
    #allocation4 [shape = 's32[1]{0}', space=sflag, size = 0x4, scoped, tag = 'scoped memory for tpu_custom_call.1']
    #allocation5 [shape = 'u8[196608]{0}', space=vmem, size = 0x30000, scoped, tag = 'input window, operand 1, single buffered']
    #allocation6 [shape = 's32[1]{0}', space=sflag, size = 0x4, scoped, tag = 'scoped memory for tpu_custom_call.1']
    #allocation7 [shape = 'u8[16384]{0}', space=vmem, size = 0x4000, scoped, tag = 'output window, operand 0, single buffered']
    %7 = vsyncpa [#allocation3], 0
    %8 = vsyncpa [#allocation6], 0
    %9 = vsyncpa [#allocation4], 0
    // Predicated region
    $region2: #{tpu_custom_call.1} parent=1 // pred_check
      _
    $region3: #{tpu_custom_call.1} parent=1 // pred_check_branch
      %11 = sbr.rel (0) target = $region5
    $region4: #{tpu_custom_call.1} parent=1 // pred_region
      %s13 = ssub.s32 512, 512
      %14 = vsyncadd [#allocation3], %s13
      %s15 = sshll.u32 [#allocation2], 4
      %s16 = int_to_ptr.vmem [resolvable:$true] %s15
      %21 = dma.hbm_to_vmem [thread:$0]  %s0, 512, %s16, [#allocation3], 256, 256, 16
    $region5: #{tpu_custom_call.1} parent=1 // pred_fallthru
      _
    // Predicated region
    $region6: #{tpu_custom_call.1} parent=1 // pred_check
      _
    $region7: #{tpu_custom_call.1} parent=1 // pred_check_branch
      %23 = sbr.rel (0) target = $region9
    $region8: #{tpu_custom_call.1} parent=1 // pred_region
      %s25 = ssub.s32 6144, 6144
      %26 = vsyncadd [#allocation6], %s25
      %s27 = sshll.u32 [#allocation5], 4
      %s28 = int_to_ptr.vmem [resolvable:$true] %s27
      %33 = dma.hbm_to_vmem [thread:$0]  %s1, 6144, %s28, [#allocation6], 256, 256, 16
    $region9: #{tpu_custom_call.1} parent=1 // pred_fallthru
      _
    // Predicated region
    $region10: #{tpu_custom_call.1} parent=1 // pred_check
      _
    $region11: #{tpu_custom_call.1} parent=1 // pred_check_branch
      %35 = sbr.rel (0) target = $region13
    $region12: #{tpu_custom_call.1} parent=1 // pred_region
      %36 = dma.done [#allocation3], 512
    $region13: #{tpu_custom_call.1} parent=1 // pred_fallthru
      _
    // Predicated region
    $region14: #{tpu_custom_call.1} parent=1 // pred_check
      _
    $region15: #{tpu_custom_call.1} parent=1 // pred_check_branch
      %38 = sbr.rel (0) target = $region17
    $region16: #{tpu_custom_call.1} parent=1 // pred_region
      %39 = dma.done [#allocation6], 6144
    $region17: #{tpu_custom_call.1} parent=1 // pred_fallthru
      _
    %v40 = vld [vmem:[#allocation2] sm:$0xff]
    %v41 = vld [vmem:[#allocation2 + $0x8] sm:$0xff]
    %v42 = vld [vmem:[#allocation2 + $0x10] sm:$0xff]
    %v43 = vld [vmem:[#allocation2 + $0x18] sm:$0xff]
    %v44 = vld [vmem:[#allocation5] sm:$0xff]
    %v45 = vld [vmem:[#allocation5 + $0x8] sm:$0xff]
    %v46 = vld [vmem:[#allocation5 + $0x10] sm:$0xff]
    %v47 = vld [vmem:[#allocation5 + $0x18] sm:$0xff]
    %v48 = vld [vmem:[#allocation5 + $0x20] sm:$0xff]
    %v49 = vld [vmem:[#allocation5 + $0x28] sm:$0xff]
    %v50 = vld [vmem:[#allocation5 + $0x30] sm:$0xff]
    %v51 = vld [vmem:[#allocation5 + $0x38] sm:$0xff]
    %v52 = vld [vmem:[#allocation5 + $0x40] sm:$0xff]
    %v53 = vld [vmem:[#allocation5 + $0x48] sm:$0xff]
    %v54 = vld [vmem:[#allocation5 + $0x50] sm:$0xff]
    %v55 = vld [vmem:[#allocation5 + $0x58] sm:$0xff]
    %v56 = vld [vmem:[#allocation5 + $0x60] sm:$0xff]
    %v57 = vld [vmem:[#allocation5 + $0x68] sm:$0xff]
    %v58 = vld [vmem:[#allocation5 + $0x70] sm:$0xff]
    %v59 = vld [vmem:[#allocation5 + $0x78] sm:$0xff]
    %v60 = vld [vmem:[#allocation5 + $0x80] sm:$0xff]
    %v61 = vld [vmem:[#allocation5 + $0x88] sm:$0xff]
    %v62 = vld [vmem:[#allocation5 + $0x90] sm:$0xff]
    %v63 = vld [vmem:[#allocation5 + $0x98] sm:$0xff]
    %v64 = vld [vmem:[#allocation5 + $0xa0] sm:$0xff]
    %v65 = vld [vmem:[#allocation5 + $0xa8] sm:$0xff]
    %v66 = vld [vmem:[#allocation5 + $0xb0] sm:$0xff]
    %v67 = vld [vmem:[#allocation5 + $0xb8] sm:$0xff]
    %v68 = vld [vmem:[#allocation5 + $0xc0] sm:$0xff]
    %v69 = vld [vmem:[#allocation5 + $0xc8] sm:$0xff]
    %v70 = vld [vmem:[#allocation5 + $0xd0] sm:$0xff]
    %v71 = vld [vmem:[#allocation5 + $0xd8] sm:$0xff]
    %v72 = vld [vmem:[#allocation5 + $0xe0] sm:$0xff]
    %v73 = vld [vmem:[#allocation5 + $0xe8] sm:$0xff]
    %v74 = vld [vmem:[#allocation5 + $0xf0] sm:$0xff]
    %v75 = vld [vmem:[#allocation5 + $0xf8] sm:$0xff]
    %v76 = vld [vmem:[#allocation5 + $0x100] sm:$0xff]
    %v77 = vld [vmem:[#allocation5 + $0x108] sm:$0xff]
    %v78 = vld [vmem:[#allocation5 + $0x110] sm:$0xff]
    %v79 = vld [vmem:[#allocation5 + $0x118] sm:$0xff]
    %v80 = vld [vmem:[#allocation5 + $0x120] sm:$0xff]
    %v81 = vld [vmem:[#allocation5 + $0x128] sm:$0xff]
    %v82 = vld [vmem:[#allocation5 + $0x130] sm:$0xff]
    %v83 = vld [vmem:[#allocation5 + $0x138] sm:$0xff]
    %v84 = vld [vmem:[#allocation5 + $0x140] sm:$0xff]
    %v85 = vld [vmem:[#allocation5 + $0x148] sm:$0xff]
    %v86 = vld [vmem:[#allocation5 + $0x150] sm:$0xff]
    %v87 = vld [vmem:[#allocation5 + $0x158] sm:$0xff]
    %v88 = vld [vmem:[#allocation5 + $0x160] sm:$0xff]
    %v89 = vld [vmem:[#allocation5 + $0x168] sm:$0xff]
    %v90 = vld [vmem:[#allocation5 + $0x170] sm:$0xff]
    %v91 = vld [vmem:[#allocation5 + $0x178] sm:$0xff]
    %vm92 = vcmask 523264
    %v94 = vsel %vm92, %v41, 0
    %v97 = vsel %vm92, %v43, 0
    %99 = vmatprep.subr.mxu0 %v45
    %100 = vmatpush1.msra.mxu0 %v44
    %101 = vmatprep.subr.mxu0 %v47
    %102 = vmatpush1.msra.mxu0 %v46
    %103 = vmatprep.subr.mxu0 %v49
    %104 = vmatpush1.msra.mxu0 %v48
    %105 = vmatprep.subr.mxu0 %v51
    %106 = vmatpush1.msra.mxu0 %v50
    %107 = vmatprep.subr.mxu0 %v53
    %108 = vmatpush1.msra.mxu0 %v52
    %109 = vmatprep.subr.mxu0 %v55
    %110 = vmatpush1.msra.mxu0 %v54
    %111 = vmatprep.subr.mxu0 %v57
    %112 = vmatpush1.msra.mxu0 %v56
    %113 = vmatprep.subr.mxu0 %v59
    %114 = vmatpush1.msra.mxu0 %v58
    %115 = vmatprep.subr.mxu0 %v61
    %116 = vmatpush1.msra.mxu0 %v60
    %117 = vmatprep.subr.mxu0 %v63
    %118 = vmatpush1.msra.mxu0 %v62
    %119 = vmatprep.subr.mxu0 %v65
    %120 = vmatpush1.msra.mxu0 %v64
    %121 = vmatprep.subr.mxu0 %v67
    %122 = vmatpush1.msra.mxu0 %v66
    %123 = vmatprep.subr.mxu0 %v69
    %124 = vmatpush1.msra.mxu0 %v68
    %125 = vmatprep.subr.mxu0 %v71
    %126 = vmatpush1.msra.mxu0 %v70
    %127 = vmatprep.subr.mxu0 %v73
    %128 = vmatpush1.msra.mxu0 %v72
    %129 = vmatprep.subr.mxu0 %v75
    %130 = vmatpush1.msra.mxu0 %v74
    %131 = vmatprep.subr.mxu0 %v77
    %132 = vmatpush1.msra.mxu0 %v76
    %133 = vmatprep.subr.mxu0 %v79
    %134 = vmatpush1.msra.mxu0 %v78
    %135 = vmatprep.subr.mxu0 %v81
    %136 = vmatpush1.msra.mxu0 %v80
    %137 = vmatprep.subr.mxu0 %v83
    %138 = vmatpush1.msra.mxu0 %v82
    %139 = vmatprep.subr.mxu0 %v85
    %140 = vmatpush1.msra.mxu0 %v84
    %141 = vmatprep.subr.mxu0 %v87
    %142 = vmatpush1.msra.mxu0 %v86
    %143 = vmatprep.subr.mxu0 %v89
    %144 = vmatpush1.msra.mxu0 %v88
    %145 = vmatprep.subr.mxu0 %v91
    %146 = vmatpush1.msra.mxu0 %v90
    %147 = vmatprep.subr.mxu0 0.0
    %148 = vmatpush1.msra.mxu0 0.0
    %149 = vmatprep.subr.mxu0 0.0
    %150 = vmatpush1.msra.mxu0 0.0
    %151 = vmatprep.subr.mxu0 0.0
    %152 = vmatpush1.msra.mxu0 0.0
    %153 = vmatprep.subr.mxu0 0.0
    %154 = vmatpush1.msra.mxu0 0.0
    %155 = vmatprep.subr.mxu0 0.0
    %156 = vmatpush1.msra.mxu0 0.0
    %157 = vmatprep.subr.mxu0 0.0
    %158 = vmatpush1.msra.mxu0 0.0
    %159 = vmatprep.subr.mxu0 0.0
    %160 = vmatpush1.msra.mxu0 0.0
    %161 = vmatprep.subr.mxu0 0.0
    %162 = vmatpush1.msra.mxu0 0.0
    %163 = vmatprep.mubr.f32.mxu0 %v94
    %164 = vmatmul.mubr.f32.gmra.mrb[0].mxu0 %v40
    %v165 = vpop.f32.mrb[0].mxu0
    %v166 = vadd.f32 0.0, %v165
    %v167 = vpop.f32.mrb[0].mxu0
    %v168 = vadd.f32 0.0, %v167
    %169 = vmatprep.mubr.f32.mxu0 %v97
    %170 = vmatmul.mubr.f32.gmra.mrb[0].mxu0 %v42
    %v171 = vpop.f32.mrb[0].mxu0
    %v172 = vadd.f32 0.0, %v171
    %v173 = vpop.f32.mrb[0].mxu0
    %v174 = vadd.f32 0.0, %v173
    %175 = vdwg.mxu0
    %176 = vst [vmem:[#allocation7] sm:$0xff] %v166
    %177 = vst.msk [vmem:[#allocation7 + $0x8] sm:$0xff] %vm92, %v168
    %178 = vst [vmem:[#allocation7 + $0x10] sm:$0xff] %v172
    %179 = vst.msk [vmem:[#allocation7 + $0x18] sm:$0xff] %vm92, %v174
    // Predicated region
    $region18: #{tpu_custom_call.1} parent=1 // pred_check
      _
    $region19: #{tpu_custom_call.1} parent=1 // pred_check_branch
      %181 = sbr.rel (0) target = $region21
    $region20: #{tpu_custom_call.1} parent=1 // pred_region
      %s183 = ssub.s32 512, 512
      %184 = vsyncadd [#allocation4], %s183
      %s185 = sshll.u32 [#allocation7], 4
      %s186 = int_to_ptr.vmem [resolvable:$true] %s185
      %191 = dma.vmem_to_hbm [thread:$0]  %s186, 512, %s2, [#allocation4], 256, 256, 16
    $region21: #{tpu_custom_call.1} parent=1 // pred_fallthru
      _
    // Predicated region
    $region22: #{tpu_custom_call.1} parent=1 // pred_check
      _
    $region23: #{tpu_custom_call.1} parent=1 // pred_check_branch
      %193 = sbr.rel (0) target = $region25
    $region24: #{tpu_custom_call.1} parent=1 // pred_region
      %194 = dma.done [#allocation4], 512
    $region25: #{tpu_custom_call.1} parent=1 // pred_fallthru
      _
    %195 = vsyncpa [#allocation3], 1
    %196 = vsyncpa [#allocation6], 1
    %197 = vsyncpa [#allocation4], 1

</llo_original>
